<compile_context>
chip_gen: v5e
topology: v5e:2x2
jax: 0.10.0
libtpu: 0.0.40
codegen_flags: <defaults>
</compile_context>

<pallas_src>
import functools

import jax
import jax.numpy as jnp
from jax.experimental import pallas as pl
from jax.experimental.pallas import tpu as pltpu

NUM_FIELDS = 10


def _embed_concat_kernel(idx_ref, tables_ref, out_ref, *, num_fields, v_pad):
    # idx_ref:    (B_tile, num_fields) int32 in VMEM
    # tables_ref: (num_fields, v_pad, D) float32 in VMEM (all tables, stacked)
    # out_ref:    (B_tile, num_fields * D) float32 in VMEM (lane-dense slab)
    b_tile = out_ref.shape[0]
    d = out_ref.shape[1] // num_fields
    # Lane iota reused by every field's one-hot compare.
    iota = jax.lax.broadcasted_iota(jnp.int32, (b_tile, v_pad), 1)
    for f in range(num_fields):                         # 10 static iterations
        col = idx_ref[:, f:f + 1]                       # (B_tile, 1) int32
        onehot = (iota == col).astype(jnp.float32)      # (B_tile, v_pad), exact 0/1
        # Exact f32 row selection on the MXU (replaces 8 serial sublane gathers).
        emb = jnp.dot(onehot, tables_ref[f],
                      preferred_element_type=jnp.float32)   # (B_tile, D)
        out_ref[:, f * d:(f + 1) * d] = emb             # unmasked full-tile store


@functools.partial(jax.jit, static_argnames=("b_tile",))
def yelp_user_forward(x, tables, b_tile=8):
    """x: (B, 10) int, tables: (10, V_pad, D) f32 -> (B, 10*D) f32."""
    B = x.shape[0]
    num_fields, v_pad, D = tables.shape

    b_padded = pl.cdiv(B, b_tile) * b_tile
    idx = x.astype(jnp.int32)
    if b_padded != B:
        idx = jnp.pad(idx, ((0, b_padded - B), (0, 0)))

    kernel = functools.partial(
        _embed_concat_kernel, num_fields=num_fields, v_pad=v_pad
    )

    out = pl.pallas_call(
        kernel,
        out_shape=jax.ShapeDtypeStruct((b_padded, num_fields * D), jnp.float32),
        grid=(b_padded // b_tile,),
        in_specs=[
            # indices: one batch tile per step, full field dim
            pl.BlockSpec((b_tile, num_fields), lambda b: (b, 0)),
            # all tables, constant block across the grid (not re-fetched)
            pl.BlockSpec((num_fields, v_pad, D), lambda b: (0, 0, 0)),
        ],
        out_specs=pl.BlockSpec((b_tile, num_fields * D), lambda b: (b, 0)),
        compiler_params=pltpu.CompilerParams(
            dimension_semantics=("parallel",),
            # actual usage here is tiny (~0.2 MiB); stays within v7x's 64 MiB
            vmem_limit_bytes=32 * 1024 * 1024,
        ),
    )(idx, tables)
    return out[:B]


def make_params(config, key):
    """Deterministically build the 10 embedding tables (N(0,1) like nn.Embedding),
    zero-padded to a common vocab size and stacked: (10, V_pad, D)."""
    field_sizes = [
        config["num_count"], config["num_fans"], config["num_stars"],
        config["num_c_hot"], config["num_c_more"], config["num_c_profile"],
        config["num_c_cute"], config["num_c_list"], config["num_c_writer"],
        config["num_c_photos"],
    ]
    D = config["embedding_dim"]
    # pad vocab to a multiple of 8 (f32 sublane tile) so the table stays aligned
    v_pad = max(8, -(-max(field_sizes) // 8) * 8)
    keys = jax.random.split(key, len(field_sizes))
    tables = []
    for k, n in zip(keys, field_sizes):
        t = jax.random.normal(k, (n, D), dtype=jnp.float32)
        t = jnp.pad(t, ((0, v_pad - n), (0, 0)))
        tables.append(t)
    return jnp.stack(tables, axis=0), field_sizes


def reference_forward(x, tables):
    # pure-JAX reference: per-field gather + concat (matches torch.cat(..., 1))
    outs = [jnp.take(tables[f], x[:, f], axis=0) for f in range(tables.shape[0])]
    return jnp.concatenate(outs, axis=1)


if __name__ == "__main__":
    config = {
        "num_count": 12, "num_fans": 9, "num_stars": 6,
        "num_c_hot": 10, "num_c_more": 8, "num_c_profile": 7,
        "num_c_cute": 5, "num_c_list": 11, "num_c_writer": 13,
        "num_c_photos": 14,
        "embedding_dim": 128,   # lane-aligned embedding dim
    }
    B = 8

    key = jax.random.PRNGKey(0)
    pkey, xkey = jax.random.split(key)
    tables, field_sizes = make_params(config, pkey)

    # x[:, f] must be a valid index into field f's table
    cols = []
    xkeys = jax.random.split(xkey, NUM_FIELDS)
    for f in range(NUM_FIELDS):
        cols.append(jax.random.randint(xkeys[f], (B,), 0, field_sizes[f],
                                       dtype=jnp.int32))
    x = jnp.stack(cols, axis=1)   # (B, 10) int32

    out = yelp_user_forward(x, tables)
    out = jax.block_until_ready(out)

    ref = reference_forward(x, tables)
    assert out.shape == (B, NUM_FIELDS * config["embedding_dim"]), out.shape
    assert jnp.allclose(out, ref, atol=1e-5, rtol=1e-5), "mismatch vs reference"

    print("KERNEL_OK")
</pallas_src>

<mosaic_0001>
module attributes {stable_mosaic.version = 11 : i64} {
  func.func @_embed_concat_kernel(%arg0: i32, %arg1: memref<8x10xi32, #tpu.memory_space<vmem>>, %arg2: memref<10x16x128xf32, #tpu.memory_space<vmem>>, %arg3: memref<8x1280xf32, #tpu.memory_space<vmem>>) attributes {dimension_semantics = [#tpu.dimension_semantics<parallel>], iteration_bounds = array<i64: 1>, scalar_prefetch = 0 : i64, scratch_operands = 0 : i64, tpu.core_type = #tpu.core_type<tc>, window_params = [{transform_indices = @transform_0, window_bounds = array<i64: 8, 10>}, {pipeline_mode = #tpu.pipeline_mode<synchronous>, transform_indices = @transform_1, window_bounds = array<i64: 10, 16, 128>}, {transform_indices = @transform_2, window_bounds = array<i64: 8, 1280>}]} {
    %0 = tpu.iota {dimensions = array<i32: 1>} : vector<8x16xi32>
    %c0 = arith.constant 0 : index
    %c0_0 = arith.constant 0 : index
    %1 = vector.load %arg1[%c0, %c0_0] : memref<8x10xi32, #tpu.memory_space<vmem>>, vector<8x1xi32>
    %2 = vector.broadcast %1 : vector<8x1xi32> to vector<8x16xi32>
    %3 = arith.cmpi eq, %0, %2 : vector<8x16xi32>
    %4 = arith.extui %3 : vector<8x16xi1> to vector<8x16xi32>
    %5 = arith.sitofp %4 : vector<8x16xi32> to vector<8x16xf32>
    %c0_1 = arith.constant 0 : index
    %c0_2 = arith.constant 0 : index
    %c0_3 = arith.constant 0 : index
    %6 = vector.load %arg2[%c0_1, %c0_2, %c0_3] : memref<10x16x128xf32, #tpu.memory_space<vmem>>, vector<1x16x128xf32>
    %7 = vector.shape_cast %6 : vector<1x16x128xf32> to vector<16x128xf32>
    %cst = arith.constant dense<0.000000e+00> : vector<8x128xf32>
    %8 = tpu.matmul %5, %7, %cst {dimension_numbers = #tpu.dot_dimension_numbers<[1], [0], [0], [1], [0, 0, 1, 1], [], []>} : vector<8x16xf32>, vector<16x128xf32>, vector<8x128xf32> -> vector<8x128xf32>
    %c0_4 = arith.constant 0 : index
    %c0_5 = arith.constant 0 : index
    %9 = vector.load %arg3[%c0_4, %c0_5] : memref<8x1280xf32, #tpu.memory_space<vmem>>, vector<8x128xf32>
    tpu.vector_store %arg3[%c0_4, %c0_5], %8 {strides = array<i32>} : memref<8x1280xf32, #tpu.memory_space<vmem>>, vector<8x128xf32>,
    %c0_6 = arith.constant 0 : index
    %c1 = arith.constant 1 : index
    %10 = vector.load %arg1[%c0_6, %c1] : memref<8x10xi32, #tpu.memory_space<vmem>>, vector<8x1xi32>
    %11 = vector.broadcast %10 : vector<8x1xi32> to vector<8x16xi32>
    %12 = arith.cmpi eq, %0, %11 : vector<8x16xi32>
    %13 = arith.extui %12 : vector<8x16xi1> to vector<8x16xi32>
    %14 = arith.sitofp %13 : vector<8x16xi32> to vector<8x16xf32>
    %c1_7 = arith.constant 1 : index
    %c0_8 = arith.constant 0 : index
    %c0_9 = arith.constant 0 : index
    %15 = vector.load %arg2[%c1_7, %c0_8, %c0_9] : memref<10x16x128xf32, #tpu.memory_space<vmem>>, vector<1x16x128xf32>
    %16 = vector.shape_cast %15 : vector<1x16x128xf32> to vector<16x128xf32>
    %cst_10 = arith.constant dense<0.000000e+00> : vector<8x128xf32>
    %17 = tpu.matmul %14, %16, %cst_10 {dimension_numbers = #tpu.dot_dimension_numbers<[1], [0], [0], [1], [0, 0, 1, 1], [], []>} : vector<8x16xf32>, vector<16x128xf32>, vector<8x128xf32> -> vector<8x128xf32>
    %c0_11 = arith.constant 0 : index
    %c128 = arith.constant 128 : index
    %18 = vector.load %arg3[%c0_11, %c128] : memref<8x1280xf32, #tpu.memory_space<vmem>>, vector<8x128xf32>
    tpu.vector_store %arg3[%c0_11, %c128], %17 {strides = array<i32>} : memref<8x1280xf32, #tpu.memory_space<vmem>>, vector<8x128xf32>,
    %c0_12 = arith.constant 0 : index
    %c2 = arith.constant 2 : index
    %19 = vector.load %arg1[%c0_12, %c2] : memref<8x10xi32, #tpu.memory_space<vmem>>, vector<8x1xi32>
    %20 = vector.broadcast %19 : vector<8x1xi32> to vector<8x16xi32>
    %21 = arith.cmpi eq, %0, %20 : vector<8x16xi32>
    %22 = arith.extui %21 : vector<8x16xi1> to vector<8x16xi32>
    %23 = arith.sitofp %22 : vector<8x16xi32> to vector<8x16xf32>
    %c2_13 = arith.constant 2 : index
    %c0_14 = arith.constant 0 : index
    %c0_15 = arith.constant 0 : index
    %24 = vector.load %arg2[%c2_13, %c0_14, %c0_15] : memref<10x16x128xf32, #tpu.memory_space<vmem>>, vector<1x16x128xf32>
    %25 = vector.shape_cast %24 : vector<1x16x128xf32> to vector<16x128xf32>
    %cst_16 = arith.constant dense<0.000000e+00> : vector<8x128xf32>
    %26 = tpu.matmul %23, %25, %cst_16 {dimension_numbers = #tpu.dot_dimension_numbers<[1], [0], [0], [1], [0, 0, 1, 1], [], []>} : vector<8x16xf32>, vector<16x128xf32>, vector<8x128xf32> -> vector<8x128xf32>
    %c0_17 = arith.constant 0 : index
    %c256 = arith.constant 256 : index
    %27 = vector.load %arg3[%c0_17, %c256] : memref<8x1280xf32, #tpu.memory_space<vmem>>, vector<8x128xf32>
    tpu.vector_store %arg3[%c0_17, %c256], %26 {strides = array<i32>} : memref<8x1280xf32, #tpu.memory_space<vmem>>, vector<8x128xf32>,
    %c0_18 = arith.constant 0 : index
    %c3 = arith.constant 3 : index
    %28 = vector.load %arg1[%c0_18, %c3] : memref<8x10xi32, #tpu.memory_space<vmem>>, vector<8x1xi32>
    %29 = vector.broadcast %28 : vector<8x1xi32> to vector<8x16xi32>
    %30 = arith.cmpi eq, %0, %29 : vector<8x16xi32>
    %31 = arith.extui %30 : vector<8x16xi1> to vector<8x16xi32>
    %32 = arith.sitofp %31 : vector<8x16xi32> to vector<8x16xf32>
    %c3_19 = arith.constant 3 : index
    %c0_20 = arith.constant 0 : index
    %c0_21 = arith.constant 0 : index
    %33 = vector.load %arg2[%c3_19, %c0_20, %c0_21] : memref<10x16x128xf32, #tpu.memory_space<vmem>>, vector<1x16x128xf32>
    %34 = vector.shape_cast %33 : vector<1x16x128xf32> to vector<16x128xf32>
    %cst_22 = arith.constant dense<0.000000e+00> : vector<8x128xf32>
    %35 = tpu.matmul %32, %34, %cst_22 {dimension_numbers = #tpu.dot_dimension_numbers<[1], [0], [0], [1], [0, 0, 1, 1], [], []>} : vector<8x16xf32>, vector<16x128xf32>, vector<8x128xf32> -> vector<8x128xf32>
    %c0_23 = arith.constant 0 : index
    %c384 = arith.constant 384 : index
    %36 = vector.load %arg3[%c0_23, %c384] : memref<8x1280xf32, #tpu.memory_space<vmem>>, vector<8x128xf32>
    tpu.vector_store %arg3[%c0_23, %c384], %35 {strides = array<i32>} : memref<8x1280xf32, #tpu.memory_space<vmem>>, vector<8x128xf32>,
    %c0_24 = arith.constant 0 : index
    %c4 = arith.constant 4 : index
    %37 = vector.load %arg1[%c0_24, %c4] : memref<8x10xi32, #tpu.memory_space<vmem>>, vector<8x1xi32>
    %38 = vector.broadcast %37 : vector<8x1xi32> to vector<8x16xi32>
    %39 = arith.cmpi eq, %0, %38 : vector<8x16xi32>
    %40 = arith.extui %39 : vector<8x16xi1> to vector<8x16xi32>
    %41 = arith.sitofp %40 : vector<8x16xi32> to vector<8x16xf32>
    %c4_25 = arith.constant 4 : index
    %c0_26 = arith.constant 0 : index
    %c0_27 = arith.constant 0 : index
    %42 = vector.load %arg2[%c4_25, %c0_26, %c0_27] : memref<10x16x128xf32, #tpu.memory_space<vmem>>, vector<1x16x128xf32>
    %43 = vector.shape_cast %42 : vector<1x16x128xf32> to vector<16x128xf32>
    %cst_28 = arith.constant dense<0.000000e+00> : vector<8x128xf32>
    %44 = tpu.matmul %41, %43, %cst_28 {dimension_numbers = #tpu.dot_dimension_numbers<[1], [0], [0], [1], [0, 0, 1, 1], [], []>} : vector<8x16xf32>, vector<16x128xf32>, vector<8x128xf32> -> vector<8x128xf32>
    %c0_29 = arith.constant 0 : index
    %c512 = arith.constant 512 : index
    %45 = vector.load %arg3[%c0_29, %c512] : memref<8x1280xf32, #tpu.memory_space<vmem>>, vector<8x128xf32>
    tpu.vector_store %arg3[%c0_29, %c512], %44 {strides = array<i32>} : memref<8x1280xf32, #tpu.memory_space<vmem>>, vector<8x128xf32>,
    %c0_30 = arith.constant 0 : index
    %c5 = arith.constant 5 : index
    %46 = vector.load %arg1[%c0_30, %c5] : memref<8x10xi32, #tpu.memory_space<vmem>>, vector<8x1xi32>
    %47 = vector.broadcast %46 : vector<8x1xi32> to vector<8x16xi32>
    %48 = arith.cmpi eq, %0, %47 : vector<8x16xi32>
    %49 = arith.extui %48 : vector<8x16xi1> to vector<8x16xi32>
    %50 = arith.sitofp %49 : vector<8x16xi32> to vector<8x16xf32>
    %c5_31 = arith.constant 5 : index
    %c0_32 = arith.constant 0 : index
    %c0_33 = arith.constant 0 : index
    %51 = vector.load %arg2[%c5_31, %c0_32, %c0_33] : memref<10x16x128xf32, #tpu.memory_space<vmem>>, vector<1x16x128xf32>
    %52 = vector.shape_cast %51 : vector<1x16x128xf32> to vector<16x128xf32>
    %cst_34 = arith.constant dense<0.000000e+00> : vector<8x128xf32>
    %53 = tpu.matmul %50, %52, %cst_34 {dimension_numbers = #tpu.dot_dimension_numbers<[1], [0], [0], [1], [0, 0, 1, 1], [], []>} : vector<8x16xf32>, vector<16x128xf32>, vector<8x128xf32> -> vector<8x128xf32>
    %c0_35 = arith.constant 0 : index
    %c640 = arith.constant 640 : index
    %54 = vector.load %arg3[%c0_35, %c640] : memref<8x1280xf32, #tpu.memory_space<vmem>>, vector<8x128xf32>
    tpu.vector_store %arg3[%c0_35, %c640], %53 {strides = array<i32>} : memref<8x1280xf32, #tpu.memory_space<vmem>>, vector<8x128xf32>,
    %c0_36 = arith.constant 0 : index
    %c6 = arith.constant 6 : index
    %55 = vector.load %arg1[%c0_36, %c6] : memref<8x10xi32, #tpu.memory_space<vmem>>, vector<8x1xi32>
    %56 = vector.broadcast %55 : vector<8x1xi32> to vector<8x16xi32>
    %57 = arith.cmpi eq, %0, %56 : vector<8x16xi32>
    %58 = arith.extui %57 : vector<8x16xi1> to vector<8x16xi32>
    %59 = arith.sitofp %58 : vector<8x16xi32> to vector<8x16xf32>
    %c6_37 = arith.constant 6 : index
    %c0_38 = arith.constant 0 : index
    %c0_39 = arith.constant 0 : index
    %60 = vector.load %arg2[%c6_37, %c0_38, %c0_39] : memref<10x16x128xf32, #tpu.memory_space<vmem>>, vector<1x16x128xf32>
    %61 = vector.shape_cast %60 : vector<1x16x128xf32> to vector<16x128xf32>
    %cst_40 = arith.constant dense<0.000000e+00> : vector<8x128xf32>
    %62 = tpu.matmul %59, %61, %cst_40 {dimension_numbers = #tpu.dot_dimension_numbers<[1], [0], [0], [1], [0, 0, 1, 1], [], []>} : vector<8x16xf32>, vector<16x128xf32>, vector<8x128xf32> -> vector<8x128xf32>
    %c0_41 = arith.constant 0 : index
    %c768 = arith.constant 768 : index
    %63 = vector.load %arg3[%c0_41, %c768] : memref<8x1280xf32, #tpu.memory_space<vmem>>, vector<8x128xf32>
    tpu.vector_store %arg3[%c0_41, %c768], %62 {strides = array<i32>} : memref<8x1280xf32, #tpu.memory_space<vmem>>, vector<8x128xf32>,
    %c0_42 = arith.constant 0 : index
    %c7 = arith.constant 7 : index
    %64 = vector.load %arg1[%c0_42, %c7] : memref<8x10xi32, #tpu.memory_space<vmem>>, vector<8x1xi32>
    %65 = vector.broadcast %64 : vector<8x1xi32> to vector<8x16xi32>
    %66 = arith.cmpi eq, %0, %65 : vector<8x16xi32>
    %67 = arith.extui %66 : vector<8x16xi1> to vector<8x16xi32>
    %68 = arith.sitofp %67 : vector<8x16xi32> to vector<8x16xf32>
    %c7_43 = arith.constant 7 : index
    %c0_44 = arith.constant 0 : index
    %c0_45 = arith.constant 0 : index
    %69 = vector.load %arg2[%c7_43, %c0_44, %c0_45] : memref<10x16x128xf32, #tpu.memory_space<vmem>>, vector<1x16x128xf32>
    %70 = vector.shape_cast %69 : vector<1x16x128xf32> to vector<16x128xf32>
    %cst_46 = arith.constant dense<0.000000e+00> : vector<8x128xf32>
    %71 = tpu.matmul %68, %70, %cst_46 {dimension_numbers = #tpu.dot_dimension_numbers<[1], [0], [0], [1], [0, 0, 1, 1], [], []>} : vector<8x16xf32>, vector<16x128xf32>, vector<8x128xf32> -> vector<8x128xf32>
    %c0_47 = arith.constant 0 : index
    %c896 = arith.constant 896 : index
    %72 = vector.load %arg3[%c0_47, %c896] : memref<8x1280xf32, #tpu.memory_space<vmem>>, vector<8x128xf32>
    tpu.vector_store %arg3[%c0_47, %c896], %71 {strides = array<i32>} : memref<8x1280xf32, #tpu.memory_space<vmem>>, vector<8x128xf32>,
    %c0_48 = arith.constant 0 : index
    %c8 = arith.constant 8 : index
    %73 = vector.load %arg1[%c0_48, %c8] : memref<8x10xi32, #tpu.memory_space<vmem>>, vector<8x1xi32>
    %74 = vector.broadcast %73 : vector<8x1xi32> to vector<8x16xi32>
    %75 = arith.cmpi eq, %0, %74 : vector<8x16xi32>
    %76 = arith.extui %75 : vector<8x16xi1> to vector<8x16xi32>
    %77 = arith.sitofp %76 : vector<8x16xi32> to vector<8x16xf32>
    %c8_49 = arith.constant 8 : index
    %c0_50 = arith.constant 0 : index
    %c0_51 = arith.constant 0 : index
    %78 = vector.load %arg2[%c8_49, %c0_50, %c0_51] : memref<10x16x128xf32, #tpu.memory_space<vmem>>, vector<1x16x128xf32>
    %79 = vector.shape_cast %78 : vector<1x16x128xf32> to vector<16x128xf32>
    %cst_52 = arith.constant dense<0.000000e+00> : vector<8x128xf32>
    %80 = tpu.matmul %77, %79, %cst_52 {dimension_numbers = #tpu.dot_dimension_numbers<[1], [0], [0], [1], [0, 0, 1, 1], [], []>} : vector<8x16xf32>, vector<16x128xf32>, vector<8x128xf32> -> vector<8x128xf32>
    %c0_53 = arith.constant 0 : index
    %c1024 = arith.constant 1024 : index
    %81 = vector.load %arg3[%c0_53, %c1024] : memref<8x1280xf32, #tpu.memory_space<vmem>>, vector<8x128xf32>
    tpu.vector_store %arg3[%c0_53, %c1024], %80 {strides = array<i32>} : memref<8x1280xf32, #tpu.memory_space<vmem>>, vector<8x128xf32>,
    %c0_54 = arith.constant 0 : index
    %c9 = arith.constant 9 : index
    %82 = vector.load %arg1[%c0_54, %c9] : memref<8x10xi32, #tpu.memory_space<vmem>>, vector<8x1xi32>
    %83 = vector.broadcast %82 : vector<8x1xi32> to vector<8x16xi32>
    %84 = arith.cmpi eq, %0, %83 : vector<8x16xi32>
    %85 = arith.extui %84 : vector<8x16xi1> to vector<8x16xi32>
    %86 = arith.sitofp %85 : vector<8x16xi32> to vector<8x16xf32>
    %c9_55 = arith.constant 9 : index
    %c0_56 = arith.constant 0 : index
    %c0_57 = arith.constant 0 : index
    %87 = vector.load %arg2[%c9_55, %c0_56, %c0_57] : memref<10x16x128xf32, #tpu.memory_space<vmem>>, vector<1x16x128xf32>
    %88 = vector.shape_cast %87 : vector<1x16x128xf32> to vector<16x128xf32>
    %cst_58 = arith.constant dense<0.000000e+00> : vector<8x128xf32>
    %89 = tpu.matmul %86, %88, %cst_58 {dimension_numbers = #tpu.dot_dimension_numbers<[1], [0], [0], [1], [0, 0, 1, 1], [], []>} : vector<8x16xf32>, vector<16x128xf32>, vector<8x128xf32> -> vector<8x128xf32>
    %c0_59 = arith.constant 0 : index
    %c1152 = arith.constant 1152 : index
    %90 = vector.load %arg3[%c0_59, %c1152] : memref<8x1280xf32, #tpu.memory_space<vmem>>, vector<8x128xf32>
    tpu.vector_store %arg3[%c0_59, %c1152], %89 {strides = array<i32>} : memref<8x1280xf32, #tpu.memory_space<vmem>>, vector<8x128xf32>,
    return
  }
  func.func @transform_0(%arg0: i32) -> (i32, i32) {
    %c0_i32 = arith.constant 0 : i32
    %c0_i32_0 = arith.constant 0 : i32
    return %arg0, %c0_i32 : i32, i32
  }
  func.func @transform_1(%arg0: i32) -> (i32, i32, i32) {
    %c0_i32 = arith.constant 0 : i32
    %c0_i32_0 = arith.constant 0 : i32
    %c0_i32_1 = arith.constant 0 : i32
    %c0_i32_2 = arith.constant 0 : i32
    return %c0_i32, %c0_i32_0, %c0_i32_1 : i32, i32, i32
  }
  func.func @transform_2(%arg0: i32) -> (i32, i32) {
    %c0_i32 = arith.constant 0 : i32
    %c0_i32_0 = arith.constant 0 : i32
    return %arg0, %c0_i32 : i32, i32
  }
}

</mosaic_0001>

<llo_original>
// kernel: yelp_user_forward.1
$region0: #{yelp_user_forward.1}
  #allocation0 [shape = 'u32[]', space=smem, size = 0x4, offset = 0x4, fixed_abs, tag = 'smem constant byte address 0x4 - core index']
  #allocation1 [shape = 'u32[72,128]{1,0:T(1,128)}', space=vmem, size = 0x9000, scoped, tag = 'internal scratch']
  %s0 = inlined_call_operand.hbm [shape: s32[8,10], index: 0, kind: input, shape index: {}]
  %s1 = inlined_call_operand.hbm [shape: f32[10,16,128], index: 1, kind: input, shape index: {}]
  %s2 = inlined_call_operand.hbm [shape: f32[8,1280], index: 2, kind: output, shape index: {}]
  %s3 = sld [smem:[#allocation0]]
  $region26: #{yelp_user_forward.1} parent=0
    _
  %s5 = ssub.s32 1, %s3
  %s6 = scalar_select 0, %s5, %s3
  $region1: #{yelp_user_forward.1} parent=0
    #allocation2 [shape = 'u8[4096]{0}', space=vmem, size = 0x1000, scoped, tag = 'input window, operand 0, single buffered']
    #allocation3 [shape = 's32[1]{0}', space=sflag, size = 0x4, scoped, tag = 'scoped memory for yelp_user_forward.1']
    #allocation4 [shape = 's32[1]{0}', space=sflag, size = 0x4, scoped, tag = 'scoped memory for yelp_user_forward.1']
    #allocation5 [shape = 'u8[81920]{0}', space=vmem, size = 0x14000, scoped, tag = 'input window, operand 1, single buffered']
    #allocation6 [shape = 's32[1]{0}', space=sflag, size = 0x4, scoped, tag = 'scoped memory for yelp_user_forward.1']
    #allocation7 [shape = 'u8[40960]{0}', space=vmem, size = 0xa000, scoped, tag = 'output window, operand 0, single buffered']
    %7 = vsyncpa [#allocation3], 0
    %8 = vsyncpa [#allocation6], 0
    %9 = vsyncpa [#allocation4], 0
    // Predicated region
    $region2: #{yelp_user_forward.1} parent=1 // pred_check
      _
    $region3: #{yelp_user_forward.1} parent=1 // pred_check_branch
      %11 = sbr.rel (0) target = $region5
    $region4: #{yelp_user_forward.1} parent=1 // pred_region
      %13 = vsyncadd [#allocation3], 0
      %s15 = sshll.u32 %s0, 4
      %s16 = int_to_ptr.hbm [resolvable:$true] %s15
      %s17 = sshll.u32 [#allocation2], 4
      %s18 = int_to_ptr.vmem [resolvable:$true] %s17
      %20 = dma.hbm_to_vmem [thread:$0]  %s16, 128, %s18, [#allocation3]
    $region5: #{yelp_user_forward.1} parent=1 // pred_fallthru
      _
    // Predicated region
    $region6: #{yelp_user_forward.1} parent=1 // pred_check
      _
    $region7: #{yelp_user_forward.1} parent=1 // pred_check_branch
      %22 = sbr.rel (0) target = $region9
    $region8: #{yelp_user_forward.1} parent=1 // pred_region
      %24 = vsyncadd [#allocation6], 0
      %s25 = sshll.u32 %s1, 4
      %s26 = int_to_ptr.hbm [resolvable:$true] %s25
      %s27 = sshll.u32 [#allocation5], 4
      %s28 = int_to_ptr.vmem [resolvable:$true] %s27
      %33 = dma.hbm_to_vmem [thread:$0]  %s26, 2560, %s28, [#allocation6], 128, 128, 8
    $region9: #{yelp_user_forward.1} parent=1 // pred_fallthru
      _
    // Predicated region
    $region10: #{yelp_user_forward.1} parent=1 // pred_check
      _
    $region11: #{yelp_user_forward.1} parent=1 // pred_check_branch
      %35 = sbr.rel (0) target = $region13
    $region12: #{yelp_user_forward.1} parent=1 // pred_region
      %37 = dma.done [#allocation3], 128
    $region13: #{yelp_user_forward.1} parent=1 // pred_fallthru
      _
    // Predicated region
    $region14: #{yelp_user_forward.1} parent=1 // pred_check
      _
    $region15: #{yelp_user_forward.1} parent=1 // pred_check_branch
      %39 = sbr.rel (0) target = $region17
    $region16: #{yelp_user_forward.1} parent=1 // pred_region
      %41 = dma.done [#allocation6], 2560
    $region17: #{yelp_user_forward.1} parent=1 // pred_fallthru
      _
    %v42 = vlaneseq
    %v43 = vand.u32 %v42, 127
    %v44 = vld [vmem:[#allocation2] sm:$0xff]
    %45 = vset.pattern.permute.xlu0 0
    %46 = vperm.xlu0 %45, %v44
    %v47 = vpop.permute.xlu0 %46
    %vm48 = vcmp.eq.s32.totalorder %v43, %v47
    %v49 = vsel %vm48, 1, 0
    %v50 = vcvt.s32.f32 %v49
    %v51 = vld [vmem:[#allocation5] sm:$0xff]
    %v52 = vld [vmem:[#allocation5 + $0x8] sm:$0xff]
    %vm53 = vcmask 130048
    %v55 = vsel %vm53, %v50, 0
    %57 = vmatpush.msra.mxu0 0.0
    %58 = vmatpush.msra.mxu0 0.0
    %59 = vmatpush.msra.mxu0 0.0
    %60 = vmatpush.msra.mxu0 0.0
    %61 = vmatpush.msra.mxu0 0.0
    %62 = vmatpush.msra.mxu0 0.0
    %63 = vmatpush.msra.mxu0 0.0
    %64 = vmatpush.msra.mxu0 0.0
    %65 = vmatpush.msra.mxu0 0.0
    %66 = vmatpush.msra.mxu0 0.0
    %67 = vmatpush.msra.mxu0 0.0
    %68 = vmatpush.msra.mxu0 0.0
    %69 = vmatpush.msra.mxu0 0.0
    %70 = vmatpush.msra.mxu0 0.0
    %71 = vmatpush.msra.mxu0 %v52
    %72 = vmatpush.msra.mxu0 %v51
    %73 = vmatmul.f32.gmra.mxu0 %v55
    %v74 = vpop.f32.mrf.mxu0
    %v75 = vadd.f32 0.0, %v74
    %76 = vdwg.mxu0
    %77 = vst [vmem:[#allocation7] sm:$0xff] %v75
    %v78 = vld [vmem:[#allocation2] sm:$0xff]
    %79 = vset.pattern.permute.xlu0 1
    %80 = vperm.xlu0 %79, %v78
    %v81 = vpop.permute.xlu0 %80
    %vm82 = vcmp.eq.s32.totalorder %v43, %v81
    %v83 = vsel %vm82, 1, 0
    %v84 = vcvt.s32.f32 %v83
    %s85 = scalar_lea.vmem [#allocation5], 16
    %v86 = vld [vmem:[%s85] sm:$0xff]
    %v87 = vld [vmem:[%s85 + $0x8] sm:$0xff]
    %v89 = vsel %vm53, %v84, 0
    %91 = vmatpush.msra.mxu0 0.0
    %92 = vmatpush.msra.mxu0 0.0
    %93 = vmatpush.msra.mxu0 0.0
    %94 = vmatpush.msra.mxu0 0.0
    %95 = vmatpush.msra.mxu0 0.0
    %96 = vmatpush.msra.mxu0 0.0
    %97 = vmatpush.msra.mxu0 0.0
    %98 = vmatpush.msra.mxu0 0.0
    %99 = vmatpush.msra.mxu0 0.0
    %100 = vmatpush.msra.mxu0 0.0
    %101 = vmatpush.msra.mxu0 0.0
    %102 = vmatpush.msra.mxu0 0.0
    %103 = vmatpush.msra.mxu0 0.0
    %104 = vmatpush.msra.mxu0 0.0
    %105 = vmatpush.msra.mxu0 %v87
    %106 = vmatpush.msra.mxu0 %v86
    %107 = vmatmul.f32.gmra.mxu0 %v89
    %v108 = vpop.f32.mrf.mxu0
    %v109 = vadd.f32 0.0, %v108
    %110 = vdwg.mxu0
    %111 = vst [vmem:[#allocation7 + $0x8] sm:$0xff] %v109
    %v112 = vld [vmem:[#allocation2] sm:$0xff]
    %113 = vset.pattern.permute.xlu0 2
    %114 = vperm.xlu0 %113, %v112
    %v115 = vpop.permute.xlu0 %114
    %vm116 = vcmp.eq.s32.totalorder %v43, %v115
    %v117 = vsel %vm116, 1, 0
    %v118 = vcvt.s32.f32 %v117
    %s119 = scalar_lea.vmem [#allocation5], 32
    %v120 = vld [vmem:[%s119] sm:$0xff]
    %v121 = vld [vmem:[%s119 + $0x8] sm:$0xff]
    %v123 = vsel %vm53, %v118, 0
    %125 = vmatpush.msra.mxu0 0.0
    %126 = vmatpush.msra.mxu0 0.0
    %127 = vmatpush.msra.mxu0 0.0
    %128 = vmatpush.msra.mxu0 0.0
    %129 = vmatpush.msra.mxu0 0.0
    %130 = vmatpush.msra.mxu0 0.0
    %131 = vmatpush.msra.mxu0 0.0
    %132 = vmatpush.msra.mxu0 0.0
    %133 = vmatpush.msra.mxu0 0.0
    %134 = vmatpush.msra.mxu0 0.0
    %135 = vmatpush.msra.mxu0 0.0
    %136 = vmatpush.msra.mxu0 0.0
    %137 = vmatpush.msra.mxu0 0.0
    %138 = vmatpush.msra.mxu0 0.0
    %139 = vmatpush.msra.mxu0 %v121
    %140 = vmatpush.msra.mxu0 %v120
    %141 = vmatmul.f32.gmra.mxu0 %v123
    %v142 = vpop.f32.mrf.mxu0
    %v143 = vadd.f32 0.0, %v142
    %144 = vdwg.mxu0
    %145 = vst [vmem:[#allocation7 + $0x10] sm:$0xff] %v143
    %v146 = vld [vmem:[#allocation2] sm:$0xff]
    %147 = vset.pattern.permute.xlu0 3
    %148 = vperm.xlu0 %147, %v146
    %v149 = vpop.permute.xlu0 %148
    %vm150 = vcmp.eq.s32.totalorder %v43, %v149
    %v151 = vsel %vm150, 1, 0
    %v152 = vcvt.s32.f32 %v151
    %s153 = scalar_lea.vmem [#allocation5], 48
    %v154 = vld [vmem:[%s153] sm:$0xff]
    %v155 = vld [vmem:[%s153 + $0x8] sm:$0xff]
    %v157 = vsel %vm53, %v152, 0
    %159 = vmatpush.msra.mxu0 0.0
    %160 = vmatpush.msra.mxu0 0.0
    %161 = vmatpush.msra.mxu0 0.0
    %162 = vmatpush.msra.mxu0 0.0
    %163 = vmatpush.msra.mxu0 0.0
    %164 = vmatpush.msra.mxu0 0.0
    %165 = vmatpush.msra.mxu0 0.0
    %166 = vmatpush.msra.mxu0 0.0
    %167 = vmatpush.msra.mxu0 0.0
    %168 = vmatpush.msra.mxu0 0.0
    %169 = vmatpush.msra.mxu0 0.0
    %170 = vmatpush.msra.mxu0 0.0
    %171 = vmatpush.msra.mxu0 0.0
    %172 = vmatpush.msra.mxu0 0.0
    %173 = vmatpush.msra.mxu0 %v155
    %174 = vmatpush.msra.mxu0 %v154
    %175 = vmatmul.f32.gmra.mxu0 %v157
    %v176 = vpop.f32.mrf.mxu0
    %v177 = vadd.f32 0.0, %v176
    %178 = vdwg.mxu0
    %179 = vst [vmem:[#allocation7 + $0x18] sm:$0xff] %v177
    %v180 = vld [vmem:[#allocation2] sm:$0xff]
    %181 = vset.pattern.permute.xlu0 4
    %182 = vperm.xlu0 %181, %v180
    %v183 = vpop.permute.xlu0 %182
    %vm184 = vcmp.eq.s32.totalorder %v43, %v183
    %v185 = vsel %vm184, 1, 0
    %v186 = vcvt.s32.f32 %v185
    %s187 = scalar_lea.vmem [#allocation5], 64
    %v188 = vld [vmem:[%s187] sm:$0xff]
    %v189 = vld [vmem:[%s187 + $0x8] sm:$0xff]
    %v191 = vsel %vm53, %v186, 0
    %193 = vmatpush.msra.mxu0 0.0
    %194 = vmatpush.msra.mxu0 0.0
    %195 = vmatpush.msra.mxu0 0.0
    %196 = vmatpush.msra.mxu0 0.0
    %197 = vmatpush.msra.mxu0 0.0
    %198 = vmatpush.msra.mxu0 0.0
    %199 = vmatpush.msra.mxu0 0.0
    %200 = vmatpush.msra.mxu0 0.0
    %201 = vmatpush.msra.mxu0 0.0
    %202 = vmatpush.msra.mxu0 0.0
    %203 = vmatpush.msra.mxu0 0.0
    %204 = vmatpush.msra.mxu0 0.0
    %205 = vmatpush.msra.mxu0 0.0
    %206 = vmatpush.msra.mxu0 0.0
    %207 = vmatpush.msra.mxu0 %v189
    %208 = vmatpush.msra.mxu0 %v188
    %209 = vmatmul.f32.gmra.mxu0 %v191
    %v210 = vpop.f32.mrf.mxu0
    %v211 = vadd.f32 0.0, %v210
    %212 = vdwg.mxu0
    %213 = vst [vmem:[#allocation7 + $0x20] sm:$0xff] %v211
    %v214 = vld [vmem:[#allocation2] sm:$0xff]
    %215 = vset.pattern.permute.xlu0 5
    %216 = vperm.xlu0 %215, %v214
    %v217 = vpop.permute.xlu0 %216
    %vm218 = vcmp.eq.s32.totalorder %v43, %v217
    %v219 = vsel %vm218, 1, 0
    %v220 = vcvt.s32.f32 %v219
    %s221 = scalar_lea.vmem [#allocation5], 80
    %v222 = vld [vmem:[%s221] sm:$0xff]
    %v223 = vld [vmem:[%s221 + $0x8] sm:$0xff]
    %v225 = vsel %vm53, %v220, 0
    %227 = vmatpush.msra.mxu0 0.0
    %228 = vmatpush.msra.mxu0 0.0
    %229 = vmatpush.msra.mxu0 0.0
    %230 = vmatpush.msra.mxu0 0.0
    %231 = vmatpush.msra.mxu0 0.0
    %232 = vmatpush.msra.mxu0 0.0
    %233 = vmatpush.msra.mxu0 0.0
    %234 = vmatpush.msra.mxu0 0.0
    %235 = vmatpush.msra.mxu0 0.0
    %236 = vmatpush.msra.mxu0 0.0
    %237 = vmatpush.msra.mxu0 0.0
    %238 = vmatpush.msra.mxu0 0.0
    %239 = vmatpush.msra.mxu0 0.0
    %240 = vmatpush.msra.mxu0 0.0
    %241 = vmatpush.msra.mxu0 %v223
    %242 = vmatpush.msra.mxu0 %v222
    %243 = vmatmul.f32.gmra.mxu0 %v225
    %v244 = vpop.f32.mrf.mxu0
    %v245 = vadd.f32 0.0, %v244
    %246 = vdwg.mxu0
    %247 = vst [vmem:[#allocation7 + $0x28] sm:$0xff] %v245
    %v248 = vld [vmem:[#allocation2] sm:$0xff]
    %249 = vset.pattern.permute.xlu0 6
    %250 = vperm.xlu0 %249, %v248
    %v251 = vpop.permute.xlu0 %250
    %vm252 = vcmp.eq.s32.totalorder %v43, %v251
    %v253 = vsel %vm252, 1, 0
    %v254 = vcvt.s32.f32 %v253
    %s255 = scalar_lea.vmem [#allocation5], 96
    %v256 = vld [vmem:[%s255] sm:$0xff]
    %v257 = vld [vmem:[%s255 + $0x8] sm:$0xff]
    %v259 = vsel %vm53, %v254, 0
    %261 = vmatpush.msra.mxu0 0.0
    %262 = vmatpush.msra.mxu0 0.0
    %263 = vmatpush.msra.mxu0 0.0
    %264 = vmatpush.msra.mxu0 0.0
    %265 = vmatpush.msra.mxu0 0.0
    %266 = vmatpush.msra.mxu0 0.0
    %267 = vmatpush.msra.mxu0 0.0
    %268 = vmatpush.msra.mxu0 0.0
    %269 = vmatpush.msra.mxu0 0.0
    %270 = vmatpush.msra.mxu0 0.0
    %271 = vmatpush.msra.mxu0 0.0
    %272 = vmatpush.msra.mxu0 0.0
    %273 = vmatpush.msra.mxu0 0.0
    %274 = vmatpush.msra.mxu0 0.0
    %275 = vmatpush.msra.mxu0 %v257
    %276 = vmatpush.msra.mxu0 %v256
    %277 = vmatmul.f32.gmra.mxu0 %v259
    %v278 = vpop.f32.mrf.mxu0
    %v279 = vadd.f32 0.0, %v278
    %280 = vdwg.mxu0
    %281 = vst [vmem:[#allocation7 + $0x30] sm:$0xff] %v279
    %v282 = vld [vmem:[#allocation2] sm:$0xff]
    %283 = vset.pattern.permute.xlu0 7
    %284 = vperm.xlu0 %283, %v282
    %v285 = vpop.permute.xlu0 %284
    %vm286 = vcmp.eq.s32.totalorder %v43, %v285
    %v287 = vsel %vm286, 1, 0
    %v288 = vcvt.s32.f32 %v287
    %s289 = scalar_lea.vmem [#allocation5], 112
    %v290 = vld [vmem:[%s289] sm:$0xff]
    %v291 = vld [vmem:[%s289 + $0x8] sm:$0xff]
    %v293 = vsel %vm53, %v288, 0
    %295 = vmatpush.msra.mxu0 0.0
    %296 = vmatpush.msra.mxu0 0.0
    %297 = vmatpush.msra.mxu0 0.0
    %298 = vmatpush.msra.mxu0 0.0
    %299 = vmatpush.msra.mxu0 0.0
    %300 = vmatpush.msra.mxu0 0.0
    %301 = vmatpush.msra.mxu0 0.0
    %302 = vmatpush.msra.mxu0 0.0
    %303 = vmatpush.msra.mxu0 0.0
    %304 = vmatpush.msra.mxu0 0.0
    %305 = vmatpush.msra.mxu0 0.0
    %306 = vmatpush.msra.mxu0 0.0
    %307 = vmatpush.msra.mxu0 0.0
    %308 = vmatpush.msra.mxu0 0.0
    %309 = vmatpush.msra.mxu0 %v291
    %310 = vmatpush.msra.mxu0 %v290
    %311 = vmatmul.f32.gmra.mxu0 %v293
    %v312 = vpop.f32.mrf.mxu0
    %v313 = vadd.f32 0.0, %v312
    %314 = vdwg.mxu0
    %315 = vst [vmem:[#allocation7 + $0x38] sm:$0xff] %v313
    %v316 = vld [vmem:[#allocation2] sm:$0xff]
    %317 = vset.pattern.permute.xlu0 8
    %318 = vperm.xlu0 %317, %v316
    %v319 = vpop.permute.xlu0 %318
    %vm320 = vcmp.eq.s32.totalorder %v43, %v319
    %v321 = vsel %vm320, 1, 0
    %v322 = vcvt.s32.f32 %v321
    %s323 = scalar_lea.vmem [#allocation5], 128
    %v324 = vld [vmem:[%s323] sm:$0xff]
    %v325 = vld [vmem:[%s323 + $0x8] sm:$0xff]
    %v327 = vsel %vm53, %v322, 0
    %329 = vmatpush.msra.mxu0 0.0
    %330 = vmatpush.msra.mxu0 0.0
    %331 = vmatpush.msra.mxu0 0.0
    %332 = vmatpush.msra.mxu0 0.0
    %333 = vmatpush.msra.mxu0 0.0
    %334 = vmatpush.msra.mxu0 0.0
    %335 = vmatpush.msra.mxu0 0.0
    %336 = vmatpush.msra.mxu0 0.0
    %337 = vmatpush.msra.mxu0 0.0
    %338 = vmatpush.msra.mxu0 0.0
    %339 = vmatpush.msra.mxu0 0.0
    %340 = vmatpush.msra.mxu0 0.0
    %341 = vmatpush.msra.mxu0 0.0
    %342 = vmatpush.msra.mxu0 0.0
    %343 = vmatpush.msra.mxu0 %v325
    %344 = vmatpush.msra.mxu0 %v324
    %345 = vmatmul.f32.gmra.mxu0 %v327
    %v346 = vpop.f32.mrf.mxu0
    %v347 = vadd.f32 0.0, %v346
    %348 = vdwg.mxu0
    %349 = vst [vmem:[#allocation7 + $0x40] sm:$0xff] %v347
    %v350 = vld [vmem:[#allocation2] sm:$0xff]
    %351 = vset.pattern.permute.xlu0 9
    %352 = vperm.xlu0 %351, %v350
    %v353 = vpop.permute.xlu0 %352
    %vm354 = vcmp.eq.s32.totalorder %v43, %v353
    %v355 = vsel %vm354, 1, 0
    %v356 = vcvt.s32.f32 %v355
    %s357 = scalar_lea.vmem [#allocation5], 144
    %v358 = vld [vmem:[%s357] sm:$0xff]
    %v359 = vld [vmem:[%s357 + $0x8] sm:$0xff]
    %v361 = vsel %vm53, %v356, 0
    %363 = vmatpush.msra.mxu0 0.0
    %364 = vmatpush.msra.mxu0 0.0
    %365 = vmatpush.msra.mxu0 0.0
    %366 = vmatpush.msra.mxu0 0.0
    %367 = vmatpush.msra.mxu0 0.0
    %368 = vmatpush.msra.mxu0 0.0
    %369 = vmatpush.msra.mxu0 0.0
    %370 = vmatpush.msra.mxu0 0.0
    %371 = vmatpush.msra.mxu0 0.0
    %372 = vmatpush.msra.mxu0 0.0
    %373 = vmatpush.msra.mxu0 0.0
    %374 = vmatpush.msra.mxu0 0.0
    %375 = vmatpush.msra.mxu0 0.0
    %376 = vmatpush.msra.mxu0 0.0
    %377 = vmatpush.msra.mxu0 %v359
    %378 = vmatpush.msra.mxu0 %v358
    %379 = vmatmul.f32.gmra.mxu0 %v361
    %v380 = vpop.f32.mrf.mxu0
    %v381 = vadd.f32 0.0, %v380
    %382 = vdwg.mxu0
    %383 = vst [vmem:[#allocation7 + $0x48] sm:$0xff] %v381
    // Predicated region
    $region18: #{yelp_user_forward.1} parent=1 // pred_check
      _
    $region19: #{yelp_user_forward.1} parent=1 // pred_check_branch
      %385 = sbr.rel (0) target = $region21
    $region20: #{yelp_user_forward.1} parent=1 // pred_region
      %387 = vsyncadd [#allocation4], 0
      %s389 = sshll.u32 [#allocation7], 4
      %s390 = int_to_ptr.vmem [resolvable:$true] %s389
      %s391 = sshll.u32 %s2, 4
      %s392 = int_to_ptr.hbm [resolvable:$true] %s391
      %394 = dma.vmem_to_hbm [thread:$0]  %s390, 1280, %s392, [#allocation4]
    $region21: #{yelp_user_forward.1} parent=1 // pred_fallthru
      _
    // Predicated region
    $region22: #{yelp_user_forward.1} parent=1 // pred_check
      _
    $region23: #{yelp_user_forward.1} parent=1 // pred_check_branch
      %396 = sbr.rel (0) target = $region25
    $region24: #{yelp_user_forward.1} parent=1 // pred_region
      %398 = dma.done [#allocation4], 1280
    $region25: #{yelp_user_forward.1} parent=1 // pred_fallthru
      _
    %399 = vsyncpa [#allocation3], 1
    %400 = vsyncpa [#allocation6], 1
    %401 = vsyncpa [#allocation4], 1

</llo_original>
